<compile_context>
chip_gen: v7x
topology: tpu7x:2x2x1
jax: 0.10.0
libtpu: 0.0.40
codegen_flags: <defaults>
</compile_context>

<pallas_src>
import jax
import jax.numpy as jnp
from jax.experimental import pallas as pl
from jax.experimental.pallas import tpu as pltpu


def _round_up(v: int, m: int) -> int:
    return (v + m - 1) // m * m


def _pad_feature(d: int) -> int:
    # Lane-dense padding only pays off once the dim reaches a full 128-lane slab;
    # below 128 a full-extent (non-128) block is legal and avoids padded HBM bytes.
    return _round_up(d, 128) if d >= 128 else d


# ---------------------------------------------------------------------------
# Kernel
# ---------------------------------------------------------------------------
def siamese_mlp_kernel(x1_ref, x2_ref, w1_ref, b1_ref, w2_ref, b2_ref,
                       o1_ref, o2_ref):
    cdt = w1_ref.dtype                      # MXU input dtype (f32 or bf16)
    tb = x1_ref.shape[0]

    # Fuse the two shared-weight branches into a single (2*tb, K) slab: one dot per
    # layer per grid step instead of two.
    x = jnp.concatenate([x1_ref[...], x2_ref[...]], axis=0).astype(cdt)   # (2tb, K)
    h = jnp.dot(x, w1_ref[...], preferred_element_type=jnp.float32)       # (2tb, Hp) f32
    h = h + b1_ref[...].astype(jnp.float32)
    h = jnp.maximum(h, 0.0)                                               # ReLU
    y = jnp.dot(h.astype(cdt), w2_ref[...],
                preferred_element_type=jnp.float32)                       # (2tb, Mp) f32
    y = y + b2_ref[...].astype(jnp.float32)

    o1_ref[...] = y[:tb].astype(o1_ref.dtype)
    o2_ref[...] = y[tb:].astype(o2_ref.dtype)


# ---------------------------------------------------------------------------
# One-time parameter packing (kernel layout (in, out), conditional lane padding)
# ---------------------------------------------------------------------------
def prepare_params(w1, b1, w2, b2, *, compute_dtype=jnp.float32):
    """w1: (nItem, hidden), b1: (hidden,), w2: (hidden, mid_dim), b2: (mid_dim,).

    Kernel layout is (in_features, out_features).  Feature dims >= 128 are padded to a
    multiple of 128 (lane-dense); smaller dims stay unpadded (full-extent blocks).
    compute_dtype=jnp.bfloat16 halves weight DMA/VMEM (f32 accumulation on the MXU);
    recommended default on v7x if the accuracy budget allows.
    """
    n_item, hidden = w1.shape
    mid_dim = w2.shape[1]
    hp = _pad_feature(hidden)
    mp = _pad_feature(mid_dim)

    def pad2(a, r, c):
        a = a.astype(compute_dtype)
        if a.shape == (r, c):
            return a
        return jnp.zeros((r, c), compute_dtype).at[:a.shape[0], :a.shape[1]].set(a)

    w1p = pad2(w1, n_item, hp)
    b1p = pad2(jnp.reshape(b1, (1, hidden)), 1, hp)
    w2p = pad2(w2, hp, mp)
    b2p = pad2(jnp.reshape(b2, (1, mid_dim)), 1, mp)
    return dict(w1=w1p, b1=b1p, w2=w2p, b2=b2p,
                n_item=n_item, hidden=hidden, mid_dim=mid_dim)


# ---------------------------------------------------------------------------
# Generation-aware VMEM budgeting + batch-tile selection
# ---------------------------------------------------------------------------
def _vmem_caps():
    """Return (tile-picker budget, vmem_limit_bytes), derived from the chip."""
    try:
        cap = int(pltpu.get_tpu_info().vmem_capacity_bytes)
    except Exception:
        cap = 64 * 1024 * 1024          # conservative fallback (v7x per-core VMEM)
    limit = (cap * 3) // 4              # ~96 MiB on 128 MiB parts, ~48 MiB on v7x
    budget = (limit * 7) // 8           # headroom for compiler-internal scratch
    return budget, limit


def _pick_tb(batch, k, hp, mp, *, x_itemsize, w_itemsize, out_itemsize,
             vmem_budget, tb_max=1024):
    """Batch tile: multiple of 8, <= tb_max, working set under the VMEM budget."""
    tb = min(_round_up(batch, 8), tb_max)
    # Prefer >= 4 grid steps when the batch is large enough that each tile stays big:
    # lets v7x shard the batch axis across both TensorCores and keeps the x-tile
    # DMA/compute pipeline busy on every generation.
    quarter = _round_up(-(-batch // 4), 8)
    if quarter >= 256:
        tb = min(tb, quarter)

    w_bytes = (k * hp + hp * mp + hp + mp) * w_itemsize   # single-buffered weights
    while True:
        # double-buffered x tiles + output tiles (two branches each)
        io_bytes = 2 * 2 * tb * (k * x_itemsize + mp * out_itemsize)
        # in-kernel transients on the fused (2*tb) slab: concat/cast copy, h (f32 +
        # compute-dtype cast), y (f32)
        tr_bytes = 2 * tb * (k * w_itemsize + hp * (4 + w_itemsize) + mp * 4)
        if w_bytes + io_bytes + tr_bytes <= vmem_budget or tb <= 8:
            break
        tb = max(8, _round_up(tb // 2, 8))
    return tb


# ---------------------------------------------------------------------------
# Forward
# ---------------------------------------------------------------------------
def siamese_forward(x1, x2, params, *, tb=None, out_dtype=None):
    """forward(x1, x2) -> (y1, y2), both through the same shared-weight MLP."""
    w1p, b1p, w2p, b2p = params["w1"], params["b1"], params["w2"], params["b2"]
    n_item, mid_dim = params["n_item"], params["mid_dim"]
    hp = w1p.shape[1]
    mp = w2p.shape[1]
    assert x1.shape == x2.shape and x1.shape[1] == n_item
    batch = x1.shape[0]
    out_dtype = x1.dtype if out_dtype is None else out_dtype

    vmem_budget, vmem_limit = _vmem_caps()
    if tb is None:
        tb = _pick_tb(batch, n_item, hp, mp,
                      x_itemsize=jnp.dtype(x1.dtype).itemsize,
                      w_itemsize=jnp.dtype(w1p.dtype).itemsize,
                      out_itemsize=jnp.dtype(out_dtype).itemsize,
                      vmem_budget=vmem_budget)
    grid = (pl.cdiv(batch, tb),)

    x_spec = pl.BlockSpec((tb, n_item), lambda i: (i, 0))
    out_spec = pl.BlockSpec((tb, mp), lambda i: (i, 0))

    def call(weight_buffers):
        def wspec(shape):
            if weight_buffers == 1:
                # Weights use a constant index map (fetched once) -> single-buffer them
                # so they don't eat VMEM twice.
                return pl.BlockSpec(shape, lambda i: (0, 0),
                                    pipeline_mode=pl.Buffered(1))
            return pl.BlockSpec(shape, lambda i: (0, 0))

        return pl.pallas_call(
            siamese_mlp_kernel,
            out_shape=(jax.ShapeDtypeStruct((batch, mp), out_dtype),
                       jax.ShapeDtypeStruct((batch, mp), out_dtype)),
            grid_spec=pltpu.PrefetchScalarGridSpec(
                num_scalar_prefetch=0,
                grid=grid,
                in_specs=[
                    x_spec,                       # x1 batch tile
                    x_spec,                       # x2 batch tile
                    wspec(w1p.shape),             # W1 (constant index, 1 buffer)
                    wspec(b1p.shape),             # b1
                    wspec(w2p.shape),             # W2
                    wspec(b2p.shape),             # b2
                ],
                out_specs=(out_spec, out_spec),
            ),
            compiler_params=pltpu.CompilerParams(
                dimension_semantics=("parallel",),
                vmem_limit_bytes=vmem_limit),
        )(x1, x2, w1p, b1p, w2p, b2p)

    try:
        y1, y2 = call(1)
    except Exception:
        # Fallback if this toolchain rejects Buffered(1) single-buffering.
        y1, y2 = call(2)

    if mp != mid_dim:
        y1, y2 = y1[:, :mid_dim], y2[:, :mid_dim]
    return y1, y2


# ---------------------------------------------------------------------------
# Synthetic init (roughly matching nn.Linear's uniform scale), kernel layout (in, out)
# ---------------------------------------------------------------------------
def init_params(key, n_item, mid_dim, dtype=jnp.float32):
    hidden = n_item // 4
    k1, k2, k3, k4 = jax.random.split(key, 4)
    s1 = 1.0 / n_item ** 0.5
    s2 = 1.0 / hidden ** 0.5
    w1 = jax.random.uniform(k1, (n_item, hidden), dtype, -s1, s1)
    b1 = jax.random.uniform(k2, (1, hidden), dtype, -s1, s1)
    w2 = jax.random.uniform(k3, (hidden, mid_dim), dtype, -s2, s2)
    b2 = jax.random.uniform(k4, (1, mid_dim), dtype, -s2, s2)
    return w1, b1, w2, b2


if __name__ == "__main__":
    key = jax.random.PRNGKey(0)

    # --- config 1: nItem=128, mid_dim=32, batch=8 (unpadded feature dims) ----------
    n_item, mid_dim, batch = 128, 32, 8
    kparam, kx1, kx2, key = jax.random.split(key, 4)
    w1, b1, w2, b2 = init_params(kparam, n_item, mid_dim)
    x1 = jax.random.normal(kx1, (batch, n_item), jnp.float32)
    x2 = jax.random.normal(kx2, (batch, n_item), jnp.float32)

    def ref(x, w1=w1, b1=b1, w2=w2, b2=b2):
        return jnp.maximum(x @ w1 + b1, 0.0) @ w2 + b2

    params_f32 = prepare_params(w1, b1, w2, b2, compute_dtype=jnp.float32)
    y1, y2 = siamese_forward(x1, x2, params_f32)
    jax.block_until_ready((y1, y2))
    assert y1.shape == (batch, mid_dim) and y2.shape == (batch, mid_dim)
    assert jnp.allclose(y1, ref(x1), atol=1e-4, rtol=1e-4)
    assert jnp.allclose(y2, ref(x2), atol=1e-4, rtol=1e-4)

    # bf16 MXU path (f32 accumulation): looser tolerance sanity check.
    params_bf16 = prepare_params(w1, b1, w2, b2, compute_dtype=jnp.bfloat16)
    z1, z2 = siamese_forward(x1, x2, params_bf16)
    jax.block_until_ready((z1, z2))
    assert jnp.allclose(z1, ref(x1), atol=5e-2, rtol=5e-2)
    assert jnp.allclose(z2, ref(x2), atol=5e-2, rtol=5e-2)

    # --- config 2: padded output dim + ragged batch (exercises masking & slicing) --
    n_item2, mid_dim2, batch2 = 256, 160, 20
    kparam2, ka, kb, key = jax.random.split(key, 4)
    w1b, b1b, w2b, b2b = init_params(kparam2, n_item2, mid_dim2)
    a1 = jax.random.normal(ka, (batch2, n_item2), jnp.float32)
    a2 = jax.random.normal(kb, (batch2, n_item2), jnp.float32)
    params2 = prepare_params(w1b, b1b, w2b, b2b, compute_dtype=jnp.float32)
    r1, r2 = siamese_forward(a1, a2, params2)
    jax.block_until_ready((r1, r2))
    ref2 = lambda x: jnp.maximum(x @ w1b + b1b, 0.0) @ w2b + b2b
    assert r1.shape == (batch2, mid_dim2) and r2.shape == (batch2, mid_dim2)
    assert jnp.allclose(r1, ref2(a1), atol=1e-4, rtol=1e-4)
    assert jnp.allclose(r2, ref2(a2), atol=1e-4, rtol=1e-4)

    print("KERNEL_OK")
</pallas_src>

<mosaic_0001>
module attributes {stable_mosaic.version = 11 : i64} {
  func.func @siamese_mlp_kernel(%arg0: i32, %arg1: memref<8x128xf32, #tpu.memory_space<vmem>>, %arg2: memref<8x128xf32, #tpu.memory_space<vmem>>, %arg3: memref<128x32xf32, #tpu.memory_space<vmem>>, %arg4: memref<1x32xf32, #tpu.memory_space<vmem>>, %arg5: memref<32x32xf32, #tpu.memory_space<vmem>>, %arg6: memref<1x32xf32, #tpu.memory_space<vmem>>, %arg7: memref<8x32xf32, #tpu.memory_space<vmem>>, %arg8: memref<8x32xf32, #tpu.memory_space<vmem>>) attributes {dimension_semantics = [#tpu.dimension_semantics<parallel>], iteration_bounds = array<i64: 1>, scalar_prefetch = 0 : i64, scratch_operands = 0 : i64, tpu.core_type = #tpu.core_type<tc>, window_params = [{transform_indices = @transform_0, window_bounds = array<i64: 8, 128>}, {transform_indices = @transform_1, window_bounds = array<i64: 8, 128>}, {pipeline_mode = #tpu.pipeline_mode<synchronous>, transform_indices = @transform_2, window_bounds = array<i64: 128, 32>}, {pipeline_mode = #tpu.pipeline_mode<synchronous>, transform_indices = @transform_3, window_bounds = array<i64: 1, 32>}, {pipeline_mode = #tpu.pipeline_mode<synchronous>, transform_indices = @transform_4, window_bounds = array<i64: 32, 32>}, {pipeline_mode = #tpu.pipeline_mode<synchronous>, transform_indices = @transform_5, window_bounds = array<i64: 1, 32>}, {transform_indices = @transform_6, window_bounds = array<i64: 8, 32>}, {transform_indices = @transform_7, window_bounds = array<i64: 8, 32>}]} {
    %c0 = arith.constant 0 : index
    %c0_0 = arith.constant 0 : index
    %0 = vector.load %arg1[%c0, %c0_0] : memref<8x128xf32, #tpu.memory_space<vmem>>, vector<8x128xf32>
    %c0_1 = arith.constant 0 : index
    %c0_2 = arith.constant 0 : index
    %1 = vector.load %arg2[%c0_1, %c0_2] : memref<8x128xf32, #tpu.memory_space<vmem>>, vector<8x128xf32>
    %2 = tpu.concatenate %0, %1 in 0 : vector<8x128xf32>, vector<8x128xf32> -> vector<16x128xf32>
    %c0_3 = arith.constant 0 : index
    %c0_4 = arith.constant 0 : index
    %3 = vector.load %arg3[%c0_3, %c0_4] : memref<128x32xf32, #tpu.memory_space<vmem>>, vector<128x32xf32>
    %cst = arith.constant dense<0.000000e+00> : vector<16x32xf32>
    %4 = tpu.matmul %2, %3, %cst {dimension_numbers = #tpu.dot_dimension_numbers<[1], [0], [0], [1], [0, 0, 1, 1], [], []>} : vector<16x128xf32>, vector<128x32xf32>, vector<16x32xf32> -> vector<16x32xf32>
    %c0_5 = arith.constant 0 : index
    %c0_6 = arith.constant 0 : index
    %5 = vector.load %arg4[%c0_5, %c0_6] : memref<1x32xf32, #tpu.memory_space<vmem>>, vector<1x32xf32>
    %6 = vector.broadcast %5 : vector<1x32xf32> to vector<16x32xf32>
    %7 = arith.addf %4, %6 : vector<16x32xf32>
    %cst_7 = arith.constant 0.000000e+00 : f32
    %8 = vector.broadcast %cst_7 : f32 to vector<16x32xf32>
    %9 = arith.maximumf %7, %8 : vector<16x32xf32>
    %c0_8 = arith.constant 0 : index
    %c0_9 = arith.constant 0 : index
    %10 = vector.load %arg5[%c0_8, %c0_9] : memref<32x32xf32, #tpu.memory_space<vmem>>, vector<32x32xf32>
    %cst_10 = arith.constant dense<0.000000e+00> : vector<16x32xf32>
    %11 = tpu.matmul %9, %10, %cst_10 {dimension_numbers = #tpu.dot_dimension_numbers<[1], [0], [0], [1], [0, 0, 1, 1], [], []>} : vector<16x32xf32>, vector<32x32xf32>, vector<16x32xf32> -> vector<16x32xf32>
    %c0_11 = arith.constant 0 : index
    %c0_12 = arith.constant 0 : index
    %12 = vector.load %arg6[%c0_11, %c0_12] : memref<1x32xf32, #tpu.memory_space<vmem>>, vector<1x32xf32>
    %13 = vector.broadcast %12 : vector<1x32xf32> to vector<16x32xf32>
    %14 = arith.addf %11, %13 : vector<16x32xf32>
    %15 = vector.extract_strided_slice %14 {offsets = [0, 0], sizes = [8, 32], strides = [1, 1]} : vector<16x32xf32> to vector<8x32xf32>
    %c0_13 = arith.constant 0 : index
    %c0_14 = arith.constant 0 : index
    %16 = vector.load %arg7[%c0_13, %c0_14] : memref<8x32xf32, #tpu.memory_space<vmem>>, vector<8x32xf32>
    tpu.vector_store %arg7[%c0_13, %c0_14], %15 {strides = array<i32>} : memref<8x32xf32, #tpu.memory_space<vmem>>, vector<8x32xf32>,
    %17 = vector.extract_strided_slice %14 {offsets = [8, 0], sizes = [8, 32], strides = [1, 1]} : vector<16x32xf32> to vector<8x32xf32>
    %c0_15 = arith.constant 0 : index
    %c0_16 = arith.constant 0 : index
    %18 = vector.load %arg8[%c0_15, %c0_16] : memref<8x32xf32, #tpu.memory_space<vmem>>, vector<8x32xf32>
    tpu.vector_store %arg8[%c0_15, %c0_16], %17 {strides = array<i32>} : memref<8x32xf32, #tpu.memory_space<vmem>>, vector<8x32xf32>,
    return
  }
  func.func @transform_0(%arg0: i32) -> (i32, i32) {
    %c0_i32 = arith.constant 0 : i32
    %c0_i32_0 = arith.constant 0 : i32
    return %arg0, %c0_i32 : i32, i32
  }
  func.func @transform_1(%arg0: i32) -> (i32, i32) {
    %c0_i32 = arith.constant 0 : i32
    %c0_i32_0 = arith.constant 0 : i32
    return %arg0, %c0_i32 : i32, i32
  }
  func.func @transform_2(%arg0: i32) -> (i32, i32) {
    %c0_i32 = arith.constant 0 : i32
    %c0_i32_0 = arith.constant 0 : i32
    %c0_i32_1 = arith.constant 0 : i32
    return %c0_i32, %c0_i32_0 : i32, i32
  }
  func.func @transform_3(%arg0: i32) -> (i32, i32) {
    %c0_i32 = arith.constant 0 : i32
    %c0_i32_0 = arith.constant 0 : i32
    %c0_i32_1 = arith.constant 0 : i32
    return %c0_i32, %c0_i32_0 : i32, i32
  }
  func.func @transform_4(%arg0: i32) -> (i32, i32) {
    %c0_i32 = arith.constant 0 : i32
    %c0_i32_0 = arith.constant 0 : i32
    %c0_i32_1 = arith.constant 0 : i32
    return %c0_i32, %c0_i32_0 : i32, i32
  }
  func.func @transform_5(%arg0: i32) -> (i32, i32) {
    %c0_i32 = arith.constant 0 : i32
    %c0_i32_0 = arith.constant 0 : i32
    %c0_i32_1 = arith.constant 0 : i32
    return %c0_i32, %c0_i32_0 : i32, i32
  }
  func.func @transform_6(%arg0: i32) -> (i32, i32) {
    %c0_i32 = arith.constant 0 : i32
    %c0_i32_0 = arith.constant 0 : i32
    return %arg0, %c0_i32 : i32, i32
  }
  func.func @transform_7(%arg0: i32) -> (i32, i32) {
    %c0_i32 = arith.constant 0 : i32
    %c0_i32_0 = arith.constant 0 : i32
    return %arg0, %c0_i32 : i32, i32
  }
}

module attributes {stable_mosaic.version = 11 : i64} {
  func.func @siamese_mlp_kernel(%arg0: i32, %arg1: memref<8x128xf32, #tpu.memory_space<vmem>>, %arg2: memref<8x128xf32, #tpu.memory_space<vmem>>, %arg3: memref<128x32xf32, #tpu.memory_space<vmem>>, %arg4: memref<1x32xf32, #tpu.memory_space<vmem>>, %arg5: memref<32x32xf32, #tpu.memory_space<vmem>>, %arg6: memref<1x32xf32, #tpu.memory_space<vmem>>, %arg7: memref<8x32xf32, #tpu.memory_space<vmem>>, %arg8: memref<8x32xf32, #tpu.memory_space<vmem>>) attributes {dimension_semantics = [#tpu.dimension_semantics<parallel>], iteration_bounds = array<i64: 1>, scalar_prefetch = 0 : i64, scratch_operands = 0 : i64, tpu.core_type = #tpu.core_type<tc>, window_params = [{transform_indices = @transform_0, window_bounds = array<i64: 8, 128>}, {transform_indices = @transform_1, window_bounds = array<i64: 8, 128>}, {pipeline_mode = #tpu.pipeline_mode<synchronous>, transform_indices = @transform_2, window_bounds = array<i64: 128, 32>}, {pipeline_mode = #tpu.pipeline_mode<synchronous>, transform_indices = @transform_3, window_bounds = array<i64: 1, 32>}, {pipeline_mode = #tpu.pipeline_mode<synchronous>, transform_indices = @transform_4, window_bounds = array<i64: 32, 32>}, {pipeline_mode = #tpu.pipeline_mode<synchronous>, transform_indices = @transform_5, window_bounds = array<i64: 1, 32>}, {transform_indices = @transform_6, window_bounds = array<i64: 8, 32>}, {transform_indices = @transform_7, window_bounds = array<i64: 8, 32>}]} {
    %c0 = arith.constant 0 : index
    %c0_0 = arith.constant 0 : index
    %0 = vector.load %arg1[%c0, %c0_0] : memref<8x128xf32, #tpu.memory_space<vmem>>, vector<8x128xf32>
    %c0_1 = arith.constant 0 : index
    %c0_2 = arith.constant 0 : index
    %1 = vector.load %arg2[%c0_1, %c0_2] : memref<8x128xf32, #tpu.memory_space<vmem>>, vector<8x128xf32>
    %2 = tpu.concatenate %0, %1 in 0 : vector<8x128xf32>, vector<8x128xf32> -> vector<16x128xf32>
    %c0_3 = arith.constant 0 : index
    %c0_4 = arith.constant 0 : index
    %3 = vector.load %arg3[%c0_3, %c0_4] : memref<128x32xf32, #tpu.memory_space<vmem>>, vector<128x32xf32>
    %cst = arith.constant dense<0.000000e+00> : vector<16x32xf32>
    %4 = tpu.matmul %2, %3, %cst {dimension_numbers = #tpu.dot_dimension_numbers<[1], [0], [0], [1], [0, 0, 1, 1], [], []>} : vector<16x128xf32>, vector<128x32xf32>, vector<16x32xf32> -> vector<16x32xf32>
    %c0_5 = arith.constant 0 : index
    %c0_6 = arith.constant 0 : index
    %5 = vector.load %arg4[%c0_5, %c0_6] : memref<1x32xf32, #tpu.memory_space<vmem>>, vector<1x32xf32>
    %6 = vector.broadcast %5 : vector<1x32xf32> to vector<16x32xf32>
    %7 = arith.addf %4, %6 : vector<16x32xf32>
    %cst_7 = arith.constant 0.000000e+00 : f32
    %8 = vector.broadcast %cst_7 : f32 to vector<16x32xf32>
    %9 = arith.maximumf %7, %8 : vector<16x32xf32>
    %c0_8 = arith.constant 0 : index
    %c0_9 = arith.constant 0 : index
    %10 = vector.load %arg5[%c0_8, %c0_9] : memref<32x32xf32, #tpu.memory_space<vmem>>, vector<32x32xf32>
    %cst_10 = arith.constant dense<0.000000e+00> : vector<16x32xf32>
    %11 = tpu.matmul %9, %10, %cst_10 {dimension_numbers = #tpu.dot_dimension_numbers<[1], [0], [0], [1], [0, 0, 1, 1], [], []>} : vector<16x32xf32>, vector<32x32xf32>, vector<16x32xf32> -> vector<16x32xf32>
    %c0_11 = arith.constant 0 : index
    %c0_12 = arith.constant 0 : index
    %12 = vector.load %arg6[%c0_11, %c0_12] : memref<1x32xf32, #tpu.memory_space<vmem>>, vector<1x32xf32>
    %13 = vector.broadcast %12 : vector<1x32xf32> to vector<16x32xf32>
    %14 = arith.addf %11, %13 : vector<16x32xf32>
    %15 = vector.extract_strided_slice %14 {offsets = [0, 0], sizes = [8, 32], strides = [1, 1]} : vector<16x32xf32> to vector<8x32xf32>
    %c0_13 = arith.constant 0 : index
    %c0_14 = arith.constant 0 : index
    %16 = vector.load %arg7[%c0_13, %c0_14] : memref<8x32xf32, #tpu.memory_space<vmem>>, vector<8x32xf32>
    tpu.vector_store %arg7[%c0_13, %c0_14], %15 {strides = array<i32>} : memref<8x32xf32, #tpu.memory_space<vmem>>, vector<8x32xf32>,
    %17 = vector.extract_strided_slice %14 {offsets = [8, 0], sizes = [8, 32], strides = [1, 1]} : vector<16x32xf32> to vector<8x32xf32>
    %c0_15 = arith.constant 0 : index
    %c0_16 = arith.constant 0 : index
    %18 = vector.load %arg8[%c0_15, %c0_16] : memref<8x32xf32, #tpu.memory_space<vmem>>, vector<8x32xf32>
    tpu.vector_store %arg8[%c0_15, %c0_16], %17 {strides = array<i32>} : memref<8x32xf32, #tpu.memory_space<vmem>>, vector<8x32xf32>,
    return
  }
  func.func @transform_0(%arg0: i32) -> (i32, i32) {
    %c0_i32 = arith.constant 0 : i32
    %c0_i32_0 = arith.constant 0 : i32
    return %arg0, %c0_i32 : i32, i32
  }
  func.func @transform_1(%arg0: i32) -> (i32, i32) {
    %c0_i32 = arith.constant 0 : i32
    %c0_i32_0 = arith.constant 0 : i32
    return %arg0, %c0_i32 : i32, i32
  }
  func.func @transform_2(%arg0: i32) -> (i32, i32) {
    %c0_i32 = arith.constant 0 : i32
    %c0_i32_0 = arith.constant 0 : i32
    %c0_i32_1 = arith.constant 0 : i32
    return %c0_i32, %c0_i32_0 : i32, i32
  }
  func.func @transform_3(%arg0: i32) -> (i32, i32) {
    %c0_i32 = arith.constant 0 : i32
    %c0_i32_0 = arith.constant 0 : i32
    %c0_i32_1 = arith.constant 0 : i32
    return %c0_i32, %c0_i32_0 : i32, i32
  }
  func.func @transform_4(%arg0: i32) -> (i32, i32) {
    %c0_i32 = arith.constant 0 : i32
    %c0_i32_0 = arith.constant 0 : i32
    %c0_i32_1 = arith.constant 0 : i32
    return %c0_i32, %c0_i32_0 : i32, i32
  }
  func.func @transform_5(%arg0: i32) -> (i32, i32) {
    %c0_i32 = arith.constant 0 : i32
    %c0_i32_0 = arith.constant 0 : i32
    %c0_i32_1 = arith.constant 0 : i32
    return %c0_i32, %c0_i32_0 : i32, i32
  }
  func.func @transform_6(%arg0: i32) -> (i32, i32) {
    %c0_i32 = arith.constant 0 : i32
    %c0_i32_0 = arith.constant 0 : i32
    return %arg0, %c0_i32 : i32, i32
  }
  func.func @transform_7(%arg0: i32) -> (i32, i32) {
    %c0_i32 = arith.constant 0 : i32
    %c0_i32_0 = arith.constant 0 : i32
    return %arg0, %c0_i32 : i32, i32
  }
}

</mosaic_0001>

<llo_original>
// kernel: tpu_custom_call.1
$region0: #{tpu_custom_call.1}
  #allocation0 [shape = 'u32[]', space=smem, size = 0x4, offset = 0x4, fixed_abs, tag = 'smem constant byte address 0x4 - core index']
  #allocation1 [shape = 'u32[144,128]{1,0:T(1,128)}', space=vmem, size = 0x12000, scoped, tag = 'internal scratch']
  %s0 = inlined_call_operand.vmem [shape: f32[8,128], index: 0, kind: input, shape index: {}]
  %s1 = inlined_call_operand.vmem [shape: f32[8,128], index: 1, kind: input, shape index: {}]
  %s2 = inlined_call_operand.vmem [shape: f32[128,32], index: 2, kind: input, shape index: {}]
  %s3 = inlined_call_operand.vmem [shape: f32[1,32], index: 3, kind: input, shape index: {}]
  %s4 = inlined_call_operand.vmem [shape: f32[32,32], index: 4, kind: input, shape index: {}]
  %s5 = inlined_call_operand.vmem [shape: f32[1,32], index: 5, kind: input, shape index: {}]
  %s6 = inlined_call_operand.hbm [shape: f32[8,32], index: 6, kind: output, shape index: {0}]
  %s7 = inlined_call_operand.hbm [shape: f32[8,32], index: 7, kind: output, shape index: {1}]
  %8 = xla_tuple %s6, %s7
  %s9 = sld [smem:[#allocation0]]
  $region42: #{tpu_custom_call.1} parent=0
    _
  %s11 = ssub.s32 1, %s9
  %s12 = scalar_select 0, %s11, %s9
  $region1: #{tpu_custom_call.1} parent=0
    #allocation2 [shape = 'u8[4096]{0}', space=vmem, size = 0x1000, scoped, tag = 'output window, operand 0, single buffered']
    #allocation3 [shape = 's32[1]{0}', space=sflag, size = 0x4, scoped, tag = 'scoped memory for tpu_custom_call.1']
    #allocation4 [shape = 'u8[4096]{0}', space=vmem, size = 0x1000, scoped, tag = 'output window, operand 1, single buffered']
    #allocation5 [shape = 's32[1]{0}', space=sflag, size = 0x4, scoped, tag = 'scoped memory for tpu_custom_call.1']
    %13 = vsyncpa [#allocation3], 0
    %14 = vsyncpa [#allocation5], 0
    // Predicated region
    $region2: #{tpu_custom_call.1} parent=1 // pred_check
      _
    $region3: #{tpu_custom_call.1} parent=1 // pred_check_branch
      %16 = sbr.rel (0) target = $region5
    $region4: #{tpu_custom_call.1} parent=1 // pred_region
      _
    $region5: #{tpu_custom_call.1} parent=1 // pred_fallthru
      _
    // Predicated region
    $region6: #{tpu_custom_call.1} parent=1 // pred_check
      _
    $region7: #{tpu_custom_call.1} parent=1 // pred_check_branch
      %18 = sbr.rel (0) target = $region9
    $region8: #{tpu_custom_call.1} parent=1 // pred_region
      _
    $region9: #{tpu_custom_call.1} parent=1 // pred_fallthru
      _
    // Predicated region
    $region10: #{tpu_custom_call.1} parent=1 // pred_check
      _
    $region11: #{tpu_custom_call.1} parent=1 // pred_check_branch
      %20 = sbr.rel (0) target = $region13
    $region12: #{tpu_custom_call.1} parent=1 // pred_region
      _
    $region13: #{tpu_custom_call.1} parent=1 // pred_fallthru
      _
    // Predicated region
    $region14: #{tpu_custom_call.1} parent=1 // pred_check
      _
    $region15: #{tpu_custom_call.1} parent=1 // pred_check_branch
      %22 = sbr.rel (0) target = $region17
    $region16: #{tpu_custom_call.1} parent=1 // pred_region
      _
    $region17: #{tpu_custom_call.1} parent=1 // pred_fallthru
      _
    // Predicated region
    $region18: #{tpu_custom_call.1} parent=1 // pred_check
      _
    $region19: #{tpu_custom_call.1} parent=1 // pred_check_branch
      %24 = sbr.rel (0) target = $region21
    $region20: #{tpu_custom_call.1} parent=1 // pred_region
      _
    $region21: #{tpu_custom_call.1} parent=1 // pred_fallthru
      _
    // Predicated region
    $region22: #{tpu_custom_call.1} parent=1 // pred_check
      _
    $region23: #{tpu_custom_call.1} parent=1 // pred_check_branch
      %26 = sbr.rel (0) target = $region25
    $region24: #{tpu_custom_call.1} parent=1 // pred_region
      _
    $region25: #{tpu_custom_call.1} parent=1 // pred_fallthru
      _
    %v27 = vld [vmem:[%s0] sm:$0xff]
    %v28 = vld [vmem:[%s1] sm:$0xff]
    %v29 = vld [vmem:[%s2] sm:$0xff]
    %v30 = vld [vmem:[%s2 + $0x8] sm:$0xff]
    %v31 = vld [vmem:[%s2 + $0x10] sm:$0xff]
    %v32 = vld [vmem:[%s2 + $0x18] sm:$0xff]
    %v33 = vld [vmem:[%s2 + $0x20] sm:$0xff]
    %v34 = vld [vmem:[%s2 + $0x28] sm:$0xff]
    %v35 = vld [vmem:[%s2 + $0x30] sm:$0xff]
    %v36 = vld [vmem:[%s2 + $0x38] sm:$0xff]
    %v37 = vld [vmem:[%s2 + $0x40] sm:$0xff]
    %v38 = vld [vmem:[%s2 + $0x48] sm:$0xff]
    %v39 = vld [vmem:[%s2 + $0x50] sm:$0xff]
    %v40 = vld [vmem:[%s2 + $0x58] sm:$0xff]
    %v41 = vld [vmem:[%s2 + $0x60] sm:$0xff]
    %v42 = vld [vmem:[%s2 + $0x68] sm:$0xff]
    %v43 = vld [vmem:[%s2 + $0x70] sm:$0xff]
    %v44 = vld [vmem:[%s2 + $0x78] sm:$0xff]
    %v45 = vld [vmem:[%s3] sm:$0x1]
    %v47 = vlaneseq
    %v48 = vshrl.u32 %v47, 7
    %v49 = vsub.s32 0, %v48
    %v50 = vrot.slane %v45, %v49
    %52 = vmatprep.subr.mxu0 0.0
    %53 = vmatpush1.msra.mxu0 %v29
    %54 = vmatprep.subr.mxu0 0.0
    %55 = vmatpush1.msra.mxu0 %v30
    %56 = vmatprep.subr.mxu0 0.0
    %57 = vmatpush1.msra.mxu0 %v31
    %58 = vmatprep.subr.mxu0 0.0
    %59 = vmatpush1.msra.mxu0 %v32
    %60 = vmatprep.subr.mxu0 0.0
    %61 = vmatpush1.msra.mxu0 %v33
    %62 = vmatprep.subr.mxu0 0.0
    %63 = vmatpush1.msra.mxu0 %v34
    %64 = vmatprep.subr.mxu0 0.0
    %65 = vmatpush1.msra.mxu0 %v35
    %66 = vmatprep.subr.mxu0 0.0
    %67 = vmatpush1.msra.mxu0 %v36
    %68 = vmatprep.subr.mxu0 0.0
    %69 = vmatpush1.msra.mxu0 %v37
    %70 = vmatprep.subr.mxu0 0.0
    %71 = vmatpush1.msra.mxu0 %v38
    %72 = vmatprep.subr.mxu0 0.0
    %73 = vmatpush1.msra.mxu0 %v39
    %74 = vmatprep.subr.mxu0 0.0
    %75 = vmatpush1.msra.mxu0 %v40
    %76 = vmatprep.subr.mxu0 0.0
    %77 = vmatpush1.msra.mxu0 %v41
    %78 = vmatprep.subr.mxu0 0.0
    %79 = vmatpush1.msra.mxu0 %v42
    %80 = vmatprep.subr.mxu0 0.0
    %81 = vmatpush1.msra.mxu0 %v43
    %82 = vmatprep.subr.mxu0 0.0
    %83 = vmatpush1.msra.mxu0 %v44
    %84 = vmatprep.subr.mxu0 0.0
    %85 = vmatpush1.msra.mxu0 0.0
    %86 = vmatprep.subr.mxu0 0.0
    %87 = vmatpush1.msra.mxu0 0.0
    %88 = vmatprep.subr.mxu0 0.0
    %89 = vmatpush1.msra.mxu0 0.0
    %90 = vmatprep.subr.mxu0 0.0
    %91 = vmatpush1.msra.mxu0 0.0
    %92 = vmatprep.subr.mxu0 0.0
    %93 = vmatpush1.msra.mxu0 0.0
    %94 = vmatprep.subr.mxu0 0.0
    %95 = vmatpush1.msra.mxu0 0.0
    %96 = vmatprep.subr.mxu0 0.0
    %97 = vmatpush1.msra.mxu0 0.0
    %98 = vmatprep.subr.mxu0 0.0
    %99 = vmatpush1.msra.mxu0 0.0
    %100 = vmatprep.subr.mxu0 0.0
    %101 = vmatpush1.msra.mxu0 0.0
    %102 = vmatprep.subr.mxu0 0.0
    %103 = vmatpush1.msra.mxu0 0.0
    %104 = vmatprep.subr.mxu0 0.0
    %105 = vmatpush1.msra.mxu0 0.0
    %106 = vmatprep.subr.mxu0 0.0
    %107 = vmatpush1.msra.mxu0 0.0
    %108 = vmatprep.subr.mxu0 0.0
    %109 = vmatpush1.msra.mxu0 0.0
    %110 = vmatprep.subr.mxu0 0.0
    %111 = vmatpush1.msra.mxu0 0.0
    %112 = vmatprep.subr.mxu0 0.0
    %113 = vmatpush1.msra.mxu0 0.0
    %114 = vmatprep.subr.mxu0 0.0
    %115 = vmatpush1.msra.mxu0 0.0
    %116 = vmatprep.mubr.f32.mxu0 0.0
    %117 = vmatmul.mubr.f32.gmra.mrb[0].mxu0 %v27
    %v118 = vpop.f32.mrb[0].mxu0
    %v119 = vadd.f32 %v50, %v118
    %v120 = vpop.f32.mrb[0].mxu0
    %121 = vmatprep.mubr.f32.mxu0 0.0
    %122 = vmatmul.mubr.f32.gmra.mrb[0].mxu0 %v28
    %v123 = vpop.f32.mrb[0].mxu0
    %v124 = vadd.f32 %v50, %v123
    %v125 = vpop.f32.mrb[0].mxu0
    %126 = vdwg.mxu0
    %v127 = vmax.f32 %v119, 0.0
    %v128 = vmax.f32 %v124, 0.0
    %v129 = vld [vmem:[%s4] sm:$0xff]
    %v130 = vld [vmem:[%s4 + $0x8] sm:$0xff]
    %v131 = vld [vmem:[%s4 + $0x10] sm:$0xff]
    %v132 = vld [vmem:[%s4 + $0x18] sm:$0xff]
    %v133 = vld [vmem:[%s5] sm:$0x1]
    %v135 = vlaneseq
    %v136 = vshrl.u32 %v135, 7
    %v137 = vsub.s32 0, %v136
    %v138 = vrot.slane %v133, %v137
    %vm140 = vcmask 261120
    %v142 = vsel %vm140, %v127, 0
    %v145 = vsel %vm140, %v128, 0
    %147 = vmatprep.subr.mxu0 0.0
    %148 = vmatpush1.msra.mxu0 %v129
    %149 = vmatprep.subr.mxu0 0.0
    %150 = vmatpush1.msra.mxu0 %v130
    %151 = vmatprep.subr.mxu0 0.0
    %152 = vmatpush1.msra.mxu0 %v131
    %153 = vmatprep.subr.mxu0 0.0
    %154 = vmatpush1.msra.mxu0 %v132
    %155 = vmatprep.subr.mxu0 0.0
    %156 = vmatpush1.msra.mxu0 0.0
    %157 = vmatprep.subr.mxu0 0.0
    %158 = vmatpush1.msra.mxu0 0.0
    %159 = vmatprep.subr.mxu0 0.0
    %160 = vmatpush1.msra.mxu0 0.0
    %161 = vmatprep.subr.mxu0 0.0
    %162 = vmatpush1.msra.mxu0 0.0
    %163 = vmatprep.subr.mxu0 0.0
    %164 = vmatpush1.msra.mxu0 0.0
    %165 = vmatprep.subr.mxu0 0.0
    %166 = vmatpush1.msra.mxu0 0.0
    %167 = vmatprep.subr.mxu0 0.0
    %168 = vmatpush1.msra.mxu0 0.0
    %169 = vmatprep.subr.mxu0 0.0
    %170 = vmatpush1.msra.mxu0 0.0
    %171 = vmatprep.subr.mxu0 0.0
    %172 = vmatpush1.msra.mxu0 0.0
    %173 = vmatprep.subr.mxu0 0.0
    %174 = vmatpush1.msra.mxu0 0.0
    %175 = vmatprep.subr.mxu0 0.0
    %176 = vmatpush1.msra.mxu0 0.0
    %177 = vmatprep.subr.mxu0 0.0
    %178 = vmatpush1.msra.mxu0 0.0
    %179 = vmatprep.subr.mxu0 0.0
    %180 = vmatpush1.msra.mxu0 0.0
    %181 = vmatprep.subr.mxu0 0.0
    %182 = vmatpush1.msra.mxu0 0.0
    %183 = vmatprep.subr.mxu0 0.0
    %184 = vmatpush1.msra.mxu0 0.0
    %185 = vmatprep.subr.mxu0 0.0
    %186 = vmatpush1.msra.mxu0 0.0
    %187 = vmatprep.subr.mxu0 0.0
    %188 = vmatpush1.msra.mxu0 0.0
    %189 = vmatprep.subr.mxu0 0.0
    %190 = vmatpush1.msra.mxu0 0.0
    %191 = vmatprep.subr.mxu0 0.0
    %192 = vmatpush1.msra.mxu0 0.0
    %193 = vmatprep.subr.mxu0 0.0
    %194 = vmatpush1.msra.mxu0 0.0
    %195 = vmatprep.subr.mxu0 0.0
    %196 = vmatpush1.msra.mxu0 0.0
    %197 = vmatprep.subr.mxu0 0.0
    %198 = vmatpush1.msra.mxu0 0.0
    %199 = vmatprep.subr.mxu0 0.0
    %200 = vmatpush1.msra.mxu0 0.0
    %201 = vmatprep.subr.mxu0 0.0
    %202 = vmatpush1.msra.mxu0 0.0
    %203 = vmatprep.subr.mxu0 0.0
    %204 = vmatpush1.msra.mxu0 0.0
    %205 = vmatprep.subr.mxu0 0.0
    %206 = vmatpush1.msra.mxu0 0.0
    %207 = vmatprep.subr.mxu0 0.0
    %208 = vmatpush1.msra.mxu0 0.0
    %209 = vmatprep.subr.mxu0 0.0
    %210 = vmatpush1.msra.mxu0 0.0
    %211 = vmatprep.mubr.f32.mxu0 0.0
    %212 = vmatmul.mubr.f32.gmra.mrb[0].mxu0 %v142
    %v213 = vpop.f32.mrb[0].mxu0
    %v214 = vadd.f32 %v138, %v213
    %v215 = vpop.f32.mrb[0].mxu0
    %216 = vmatprep.mubr.f32.mxu0 0.0
    %217 = vmatmul.mubr.f32.gmra.mrb[0].mxu0 %v145
    %v218 = vpop.f32.mrb[0].mxu0
    %v219 = vadd.f32 %v138, %v218
    %v220 = vpop.f32.mrb[0].mxu0
    %221 = vdwg.mxu0
    %222 = vst.msk [vmem:[#allocation2] sm:$0xff] %vm140, %v214
    %223 = vst.msk [vmem:[#allocation4] sm:$0xff] %vm140, %v219
    // Predicated region
    $region26: #{tpu_custom_call.1} parent=1 // pred_check
      _
    $region27: #{tpu_custom_call.1} parent=1 // pred_check_branch
      %225 = sbr.rel (0) target = $region29
    $region28: #{tpu_custom_call.1} parent=1 // pred_region
      %s227 = ssub.s32 128, 128
      %228 = vsyncadd [#allocation3], %s227
      %s230 = sshll.u32 [#allocation2], 4
      %s231 = int_to_ptr.vmem [resolvable:$true] %s230
      %233 = dma.vmem_to_hbm [thread:$0]  %s231, 128, %s6, [#allocation3]
    $region29: #{tpu_custom_call.1} parent=1 // pred_fallthru
      _
    // Predicated region
    $region30: #{tpu_custom_call.1} parent=1 // pred_check
      _
    $region31: #{tpu_custom_call.1} parent=1 // pred_check_branch
      %235 = sbr.rel (0) target = $region33
    $region32: #{tpu_custom_call.1} parent=1 // pred_region
      %s237 = ssub.s32 128, 128
      %238 = vsyncadd [#allocation5], %s237
      %s240 = sshll.u32 [#allocation4], 4
      %s241 = int_to_ptr.vmem [resolvable:$true] %s240
      %243 = dma.vmem_to_hbm [thread:$0]  %s241, 128, %s7, [#allocation5]
    $region33: #{tpu_custom_call.1} parent=1 // pred_fallthru
      _
    // Predicated region
    $region34: #{tpu_custom_call.1} parent=1 // pred_check
      _
    $region35: #{tpu_custom_call.1} parent=1 // pred_check_branch
      %245 = sbr.rel (0) target = $region37
    $region36: #{tpu_custom_call.1} parent=1 // pred_region
      %246 = dma.done [#allocation3], 128
    $region37: #{tpu_custom_call.1} parent=1 // pred_fallthru
      _
    // Predicated region
    $region38: #{tpu_custom_call.1} parent=1 // pred_check
      _
    $region39: #{tpu_custom_call.1} parent=1 // pred_check_branch
      %248 = sbr.rel (0) target = $region41
    $region40: #{tpu_custom_call.1} parent=1 // pred_region
      %249 = dma.done [#allocation5], 128
    $region41: #{tpu_custom_call.1} parent=1 // pred_fallthru
      _
    %250 = vsyncpa [#allocation3], 1
    %251 = vsyncpa [#allocation5], 1

// kernel: tpu_custom_call.1
$region0: #{tpu_custom_call.1}
  #allocation0 [shape = 'u32[]', space=smem, size = 0x4, offset = 0x4, fixed_abs, tag = 'smem constant byte address 0x4 - core index']
  #allocation1 [shape = 'u32[144,128]{1,0:T(1,128)}', space=vmem, size = 0x12000, scoped, tag = 'internal scratch']
  %s0 = inlined_call_operand.vmem [shape: f32[8,128], index: 0, kind: input, shape index: {}]
  %s1 = inlined_call_operand.vmem [shape: f32[8,128], index: 1, kind: input, shape index: {}]
  %s2 = inlined_call_operand.vmem [shape: f32[128,32], index: 2, kind: input, shape index: {}]
  %s3 = inlined_call_operand.vmem [shape: f32[1,32], index: 3, kind: input, shape index: {}]
  %s4 = inlined_call_operand.vmem [shape: f32[32,32], index: 4, kind: input, shape index: {}]
  %s5 = inlined_call_operand.vmem [shape: f32[1,32], index: 5, kind: input, shape index: {}]
  %s6 = inlined_call_operand.hbm [shape: f32[8,32], index: 6, kind: output, shape index: {0}]
  %s7 = inlined_call_operand.hbm [shape: f32[8,32], index: 7, kind: output, shape index: {1}]
  %8 = xla_tuple %s6, %s7
  %s9 = sld [smem:[#allocation0]]
  $region42: #{tpu_custom_call.1} parent=0
    _
  %s11 = ssub.s32 1, %s9
  %s12 = scalar_select 0, %s11, %s9
  $region1: #{tpu_custom_call.1} parent=0
    #allocation2 [shape = 'u8[4096]{0}', space=vmem, size = 0x1000, scoped, tag = 'output window, operand 0, single buffered']
    #allocation3 [shape = 's32[1]{0}', space=sflag, size = 0x4, scoped, tag = 'scoped memory for tpu_custom_call.1']
    #allocation4 [shape = 'u8[4096]{0}', space=vmem, size = 0x1000, scoped, tag = 'output window, operand 1, single buffered']
    #allocation5 [shape = 's32[1]{0}', space=sflag, size = 0x4, scoped, tag = 'scoped memory for tpu_custom_call.1']
    %13 = vsyncpa [#allocation3], 0
    %14 = vsyncpa [#allocation5], 0
    // Predicated region
    $region2: #{tpu_custom_call.1} parent=1 // pred_check
      _
    $region3: #{tpu_custom_call.1} parent=1 // pred_check_branch
      %16 = sbr.rel (0) target = $region5
    $region4: #{tpu_custom_call.1} parent=1 // pred_region
      _
    $region5: #{tpu_custom_call.1} parent=1 // pred_fallthru
      _
    // Predicated region
    $region6: #{tpu_custom_call.1} parent=1 // pred_check
      _
    $region7: #{tpu_custom_call.1} parent=1 // pred_check_branch
      %18 = sbr.rel (0) target = $region9
    $region8: #{tpu_custom_call.1} parent=1 // pred_region
      _
    $region9: #{tpu_custom_call.1} parent=1 // pred_fallthru
      _
    // Predicated region
    $region10: #{tpu_custom_call.1} parent=1 // pred_check
      _
    $region11: #{tpu_custom_call.1} parent=1 // pred_check_branch
      %20 = sbr.rel (0) target = $region13
    $region12: #{tpu_custom_call.1} parent=1 // pred_region
      _
    $region13: #{tpu_custom_call.1} parent=1 // pred_fallthru
      _
    // Predicated region
    $region14: #{tpu_custom_call.1} parent=1 // pred_check
      _
    $region15: #{tpu_custom_call.1} parent=1 // pred_check_branch
      %22 = sbr.rel (0) target = $region17
    $region16: #{tpu_custom_call.1} parent=1 // pred_region
      _
    $region17: #{tpu_custom_call.1} parent=1 // pred_fallthru
      _
    // Predicated region
    $region18: #{tpu_custom_call.1} parent=1 // pred_check
      _
    $region19: #{tpu_custom_call.1} parent=1 // pred_check_branch
      %24 = sbr.rel (0) target = $region21
    $region20: #{tpu_custom_call.1} parent=1 // pred_region
      _
    $region21: #{tpu_custom_call.1} parent=1 // pred_fallthru
      _
    // Predicated region
    $region22: #{tpu_custom_call.1} parent=1 // pred_check
      _
    $region23: #{tpu_custom_call.1} parent=1 // pred_check_branch
      %26 = sbr.rel (0) target = $region25
    $region24: #{tpu_custom_call.1} parent=1 // pred_region
      _
    $region25: #{tpu_custom_call.1} parent=1 // pred_fallthru
      _
    %v27 = vld [vmem:[%s0] sm:$0xff]
    %v28 = vld [vmem:[%s1] sm:$0xff]
    %v29 = vld [vmem:[%s2] sm:$0xff]
    %v30 = vld [vmem:[%s2 + $0x8] sm:$0xff]
    %v31 = vld [vmem:[%s2 + $0x10] sm:$0xff]
    %v32 = vld [vmem:[%s2 + $0x18] sm:$0xff]
    %v33 = vld [vmem:[%s2 + $0x20] sm:$0xff]
    %v34 = vld [vmem:[%s2 + $0x28] sm:$0xff]
    %v35 = vld [vmem:[%s2 + $0x30] sm:$0xff]
    %v36 = vld [vmem:[%s2 + $0x38] sm:$0xff]
    %v37 = vld [vmem:[%s2 + $0x40] sm:$0xff]
    %v38 = vld [vmem:[%s2 + $0x48] sm:$0xff]
    %v39 = vld [vmem:[%s2 + $0x50] sm:$0xff]
    %v40 = vld [vmem:[%s2 + $0x58] sm:$0xff]
    %v41 = vld [vmem:[%s2 + $0x60] sm:$0xff]
    %v42 = vld [vmem:[%s2 + $0x68] sm:$0xff]
    %v43 = vld [vmem:[%s2 + $0x70] sm:$0xff]
    %v44 = vld [vmem:[%s2 + $0x78] sm:$0xff]
    %v45 = vld [vmem:[%s3] sm:$0x1]
    %v47 = vlaneseq
    %v48 = vshrl.u32 %v47, 7
    %v49 = vsub.s32 0, %v48
    %v50 = vrot.slane %v45, %v49
    %52 = vmatprep.subr.mxu0 0.0
    %53 = vmatpush1.msra.mxu0 %v29
    %54 = vmatprep.subr.mxu0 0.0
    %55 = vmatpush1.msra.mxu0 %v30
    %56 = vmatprep.subr.mxu0 0.0
    %57 = vmatpush1.msra.mxu0 %v31
    %58 = vmatprep.subr.mxu0 0.0
    %59 = vmatpush1.msra.mxu0 %v32
    %60 = vmatprep.subr.mxu0 0.0
    %61 = vmatpush1.msra.mxu0 %v33
    %62 = vmatprep.subr.mxu0 0.0
    %63 = vmatpush1.msra.mxu0 %v34
    %64 = vmatprep.subr.mxu0 0.0
    %65 = vmatpush1.msra.mxu0 %v35
    %66 = vmatprep.subr.mxu0 0.0
    %67 = vmatpush1.msra.mxu0 %v36
    %68 = vmatprep.subr.mxu0 0.0
    %69 = vmatpush1.msra.mxu0 %v37
    %70 = vmatprep.subr.mxu0 0.0
    %71 = vmatpush1.msra.mxu0 %v38
    %72 = vmatprep.subr.mxu0 0.0
    %73 = vmatpush1.msra.mxu0 %v39
    %74 = vmatprep.subr.mxu0 0.0
    %75 = vmatpush1.msra.mxu0 %v40
    %76 = vmatprep.subr.mxu0 0.0
    %77 = vmatpush1.msra.mxu0 %v41
    %78 = vmatprep.subr.mxu0 0.0
    %79 = vmatpush1.msra.mxu0 %v42
    %80 = vmatprep.subr.mxu0 0.0
    %81 = vmatpush1.msra.mxu0 %v43
    %82 = vmatprep.subr.mxu0 0.0
    %83 = vmatpush1.msra.mxu0 %v44
    %84 = vmatprep.subr.mxu0 0.0
    %85 = vmatpush1.msra.mxu0 0.0
    %86 = vmatprep.subr.mxu0 0.0
    %87 = vmatpush1.msra.mxu0 0.0
    %88 = vmatprep.subr.mxu0 0.0
    %89 = vmatpush1.msra.mxu0 0.0
    %90 = vmatprep.subr.mxu0 0.0
    %91 = vmatpush1.msra.mxu0 0.0
    %92 = vmatprep.subr.mxu0 0.0
    %93 = vmatpush1.msra.mxu0 0.0
    %94 = vmatprep.subr.mxu0 0.0
    %95 = vmatpush1.msra.mxu0 0.0
    %96 = vmatprep.subr.mxu0 0.0
    %97 = vmatpush1.msra.mxu0 0.0
    %98 = vmatprep.subr.mxu0 0.0
    %99 = vmatpush1.msra.mxu0 0.0
    %100 = vmatprep.subr.mxu0 0.0
    %101 = vmatpush1.msra.mxu0 0.0
    %102 = vmatprep.subr.mxu0 0.0
    %103 = vmatpush1.msra.mxu0 0.0
    %104 = vmatprep.subr.mxu0 0.0
    %105 = vmatpush1.msra.mxu0 0.0
    %106 = vmatprep.subr.mxu0 0.0
    %107 = vmatpush1.msra.mxu0 0.0
    %108 = vmatprep.subr.mxu0 0.0
    %109 = vmatpush1.msra.mxu0 0.0
    %110 = vmatprep.subr.mxu0 0.0
    %111 = vmatpush1.msra.mxu0 0.0
    %112 = vmatprep.subr.mxu0 0.0
    %113 = vmatpush1.msra.mxu0 0.0
    %114 = vmatprep.subr.mxu0 0.0
    %115 = vmatpush1.msra.mxu0 0.0
    %116 = vmatprep.mubr.f32.mxu0 0.0
    %117 = vmatmul.mubr.f32.gmra.mrb[0].mxu0 %v27
    %v118 = vpop.f32.mrb[0].mxu0
    %v119 = vadd.f32 %v50, %v118
    %v120 = vpop.f32.mrb[0].mxu0
    %121 = vmatprep.mubr.f32.mxu0 0.0
    %122 = vmatmul.mubr.f32.gmra.mrb[0].mxu0 %v28
    %v123 = vpop.f32.mrb[0].mxu0
    %v124 = vadd.f32 %v50, %v123
    %v125 = vpop.f32.mrb[0].mxu0
    %126 = vdwg.mxu0
    %v127 = vmax.f32 %v119, 0.0
    %v128 = vmax.f32 %v124, 0.0
    %v129 = vld [vmem:[%s4] sm:$0xff]
    %v130 = vld [vmem:[%s4 + $0x8] sm:$0xff]
    %v131 = vld [vmem:[%s4 + $0x10] sm:$0xff]
    %v132 = vld [vmem:[%s4 + $0x18] sm:$0xff]
    %v133 = vld [vmem:[%s5] sm:$0x1]
    %v135 = vlaneseq
    %v136 = vshrl.u32 %v135, 7
    %v137 = vsub.s32 0, %v136
    %v138 = vrot.slane %v133, %v137
    %vm140 = vcmask 261120
    %v142 = vsel %vm140, %v127, 0
    %v145 = vsel %vm140, %v128, 0
    %147 = vmatprep.subr.mxu0 0.0
    %148 = vmatpush1.msra.mxu0 %v129
    %149 = vmatprep.subr.mxu0 0.0
    %150 = vmatpush1.msra.mxu0 %v130
    %151 = vmatprep.subr.mxu0 0.0
    %152 = vmatpush1.msra.mxu0 %v131
    %153 = vmatprep.subr.mxu0 0.0
    %154 = vmatpush1.msra.mxu0 %v132
    %155 = vmatprep.subr.mxu0 0.0
    %156 = vmatpush1.msra.mxu0 0.0
    %157 = vmatprep.subr.mxu0 0.0
    %158 = vmatpush1.msra.mxu0 0.0
    %159 = vmatprep.subr.mxu0 0.0
    %160 = vmatpush1.msra.mxu0 0.0
    %161 = vmatprep.subr.mxu0 0.0
    %162 = vmatpush1.msra.mxu0 0.0
    %163 = vmatprep.subr.mxu0 0.0
    %164 = vmatpush1.msra.mxu0 0.0
    %165 = vmatprep.subr.mxu0 0.0
    %166 = vmatpush1.msra.mxu0 0.0
    %167 = vmatprep.subr.mxu0 0.0
    %168 = vmatpush1.msra.mxu0 0.0
    %169 = vmatprep.subr.mxu0 0.0
    %170 = vmatpush1.msra.mxu0 0.0
    %171 = vmatprep.subr.mxu0 0.0
    %172 = vmatpush1.msra.mxu0 0.0
    %173 = vmatprep.subr.mxu0 0.0
    %174 = vmatpush1.msra.mxu0 0.0
    %175 = vmatprep.subr.mxu0 0.0
    %176 = vmatpush1.msra.mxu0 0.0
    %177 = vmatprep.subr.mxu0 0.0
    %178 = vmatpush1.msra.mxu0 0.0
    %179 = vmatprep.subr.mxu0 0.0
    %180 = vmatpush1.msra.mxu0 0.0
    %181 = vmatprep.subr.mxu0 0.0
    %182 = vmatpush1.msra.mxu0 0.0
    %183 = vmatprep.subr.mxu0 0.0
    %184 = vmatpush1.msra.mxu0 0.0
    %185 = vmatprep.subr.mxu0 0.0
    %186 = vmatpush1.msra.mxu0 0.0
    %187 = vmatprep.subr.mxu0 0.0
    %188 = vmatpush1.msra.mxu0 0.0
    %189 = vmatprep.subr.mxu0 0.0
    %190 = vmatpush1.msra.mxu0 0.0
    %191 = vmatprep.subr.mxu0 0.0
    %192 = vmatpush1.msra.mxu0 0.0
    %193 = vmatprep.subr.mxu0 0.0
    %194 = vmatpush1.msra.mxu0 0.0
    %195 = vmatprep.subr.mxu0 0.0
    %196 = vmatpush1.msra.mxu0 0.0
    %197 = vmatprep.subr.mxu0 0.0
    %198 = vmatpush1.msra.mxu0 0.0
    %199 = vmatprep.subr.mxu0 0.0
    %200 = vmatpush1.msra.mxu0 0.0
    %201 = vmatprep.subr.mxu0 0.0
    %202 = vmatpush1.msra.mxu0 0.0
    %203 = vmatprep.subr.mxu0 0.0
    %204 = vmatpush1.msra.mxu0 0.0
    %205 = vmatprep.subr.mxu0 0.0
    %206 = vmatpush1.msra.mxu0 0.0
    %207 = vmatprep.subr.mxu0 0.0
    %208 = vmatpush1.msra.mxu0 0.0
    %209 = vmatprep.subr.mxu0 0.0
    %210 = vmatpush1.msra.mxu0 0.0
    %211 = vmatprep.mubr.f32.mxu0 0.0
    %212 = vmatmul.mubr.f32.gmra.mrb[0].mxu0 %v142
    %v213 = vpop.f32.mrb[0].mxu0
    %v214 = vadd.f32 %v138, %v213
    %v215 = vpop.f32.mrb[0].mxu0
    %216 = vmatprep.mubr.f32.mxu0 0.0
    %217 = vmatmul.mubr.f32.gmra.mrb[0].mxu0 %v145
    %v218 = vpop.f32.mrb[0].mxu0
    %v219 = vadd.f32 %v138, %v218
    %v220 = vpop.f32.mrb[0].mxu0
    %221 = vdwg.mxu0
    %222 = vst.msk [vmem:[#allocation2] sm:$0xff] %vm140, %v214
    %223 = vst.msk [vmem:[#allocation4] sm:$0xff] %vm140, %v219
    // Predicated region
    $region26: #{tpu_custom_call.1} parent=1 // pred_check
      _
    $region27: #{tpu_custom_call.1} parent=1 // pred_check_branch
      %225 = sbr.rel (0) target = $region29
    $region28: #{tpu_custom_call.1} parent=1 // pred_region
      %s227 = ssub.s32 128, 128
      %228 = vsyncadd [#allocation3], %s227
      %s230 = sshll.u32 [#allocation2], 4
      %s231 = int_to_ptr.vmem [resolvable:$true] %s230
      %233 = dma.vmem_to_hbm [thread:$0]  %s231, 128, %s6, [#allocation3]
    $region29: #{tpu_custom_call.1} parent=1 // pred_fallthru
      _
    // Predicated region
    $region30: #{tpu_custom_call.1} parent=1 // pred_check
      _
    $region31: #{tpu_custom_call.1} parent=1 // pred_check_branch
      %235 = sbr.rel (0) target = $region33
    $region32: #{tpu_custom_call.1} parent=1 // pred_region
      %s237 = ssub.s32 128, 128
      %238 = vsyncadd [#allocation5], %s237
      %s240 = sshll.u32 [#allocation4], 4
      %s241 = int_to_ptr.vmem [resolvable:$true] %s240
      %243 = dma.vmem_to_hbm [thread:$0]  %s241, 128, %s7, [#allocation5]
    $region33: #{tpu_custom_call.1} parent=1 // pred_fallthru
      _
    // Predicated region
    $region34: #{tpu_custom_call.1} parent=1 // pred_check
      _
    $region35: #{tpu_custom_call.1} parent=1 // pred_check_branch
      %245 = sbr.rel (0) target = $region37
    $region36: #{tpu_custom_call.1} parent=1 // pred_region
      %246 = dma.done [#allocation3], 128
    $region37: #{tpu_custom_call.1} parent=1 // pred_fallthru
      _
    // Predicated region
    $region38: #{tpu_custom_call.1} parent=1 // pred_check
      _
    $region39: #{tpu_custom_call.1} parent=1 // pred_check_branch
      %248 = sbr.rel (0) target = $region41
    $region40: #{tpu_custom_call.1} parent=1 // pred_region
      %249 = dma.done [#allocation5], 128
    $region41: #{tpu_custom_call.1} parent=1 // pred_fallthru
      _
    %250 = vsyncpa [#allocation3], 1
    %251 = vsyncpa [#allocation5], 1

</llo_original>
